<compile_context>
chip_gen: v6e
topology: v6e:2x2x1
jax: 0.10.0
libtpu: 0.0.40
codegen_flags: <defaults>
</compile_context>

<pallas_src>
import functools

import jax
import jax.numpy as jnp
from jax.experimental import pallas as pl
from jax.experimental.pallas import tpu as pltpu


def _round_up(x, m):
    return (x + m - 1) // m * m


def _shift_channels(p, off):
    """s[:, c, :] = p[:, c + off, :] (zero outside range). p: (B, C, 1)."""
    if off == 0:
        return p
    b = p.shape[0]
    z = jnp.zeros((b, abs(off), 1), dtype=p.dtype)
    if off > 0:
        return jnp.concatenate([p[:, off:, :], z], axis=1)
    return jnp.concatenate([z, p[:, :off, :]], axis=1)


def _pool_gate_kernel(w_ref, x_ref, gate_ref, *, inv_hw, k_size):
    """Accumulate spatial sums; on last HW tile emit sigmoid(conv1d(mean))."""
    hw_i = pl.program_id(1)

    @pl.when(hw_i == 0)
    def _init():
        gate_ref[...] = jnp.zeros_like(gate_ref)

    x = x_ref[...].astype(jnp.float32)                     # (B_blk, C, HW_tile)
    gate_ref[...] += jnp.sum(x, axis=-1, keepdims=True)    # accumulate in f32

    @pl.when(hw_i == pl.num_programs(1) - 1)
    def _finalize():
        pooled = gate_ref[...] * inv_hw                    # mean, (B_blk, C, 1)
        pad = (k_size - 1) // 2
        y = jnp.zeros_like(pooled)
        for j in range(k_size):                            # k-tap conv over channels
            y = y + w_ref[j] * _shift_channels(pooled, j - pad)
        gate_ref[...] = jax.nn.sigmoid(y)


def _scale_kernel(x_ref, gate_ref, o_ref):
    x = x_ref[...].astype(jnp.float32)                     # (B_blk, C, HW_tile)
    g = gate_ref[...]                                      # (B_blk, C, 1) f32
    o_ref[...] = (x * g).astype(o_ref.dtype)


def eca_forward(x, conv_w, k_size=3):
    """x: (N, C, H, W); conv_w: (1, 1, k_size) Conv1d weight (no bias)."""
    N, C, H, W = x.shape
    HW = H * W
    el = jnp.dtype(x.dtype).itemsize

    # Lane-dense HW tile: multiple of 128, ~<=1 MiB per x block so that
    # double-buffered in+out stays far below even v5e's scoped VMEM.
    TILE_BYTES = 1 << 20
    lane_budget = max(128, (TILE_BYTES // max(C * el, 1)) // 128 * 128)
    hw_tile = min(_round_up(HW, 128), lane_budget)
    hw_pad = _round_up(HW, hw_tile)
    n_hw = hw_pad // hw_tile

    # Pack several batch items per block for small shapes (fills sublanes,
    # amortizes per-grid-step overhead) while keeping blocks pipeline-sized.
    BLK_BYTES = 2 << 20
    b_blk = 1
    for b in range(N, 0, -1):
        if N % b == 0 and b * C * hw_tile * el <= BLK_BYTES:
            b_blk = b
            break
    n_b = N // b_blk

    x2 = x.reshape(N, C, HW)
    if hw_pad != HW:
        x2 = jnp.pad(x2, ((0, 0), (0, 0), (0, hw_pad - HW)))

    w = conv_w.reshape(-1).astype(jnp.float32)             # (k_size,) scalars

    vmem_limit = 32 * 1024 * 1024

    # Pass 1: pooled sums -> gate (N, C, 1) in float32.
    gate = pl.pallas_call(
        functools.partial(_pool_gate_kernel, inv_hw=1.0 / HW, k_size=k_size),
        out_shape=jax.ShapeDtypeStruct((N, C, 1), jnp.float32),
        grid=(n_b, n_hw),
        in_specs=[
            pl.BlockSpec(memory_space=pltpu.MemorySpace.SMEM),
            pl.BlockSpec((b_blk, C, hw_tile), lambda b, h: (b, 0, h)),
        ],
        out_specs=pl.BlockSpec((b_blk, C, 1), lambda b, h: (b, 0, 0)),
        compiler_params=pltpu.CompilerParams(
            dimension_semantics=("parallel", "arbitrary"),
            vmem_limit_bytes=vmem_limit),
    )(w, x2)

    # Pass 2: scale x by the gate (fully parallel grid).
    out = pl.pallas_call(
        _scale_kernel,
        out_shape=jax.ShapeDtypeStruct((N, C, hw_pad), x.dtype),
        grid=(n_b, n_hw),
        in_specs=[
            pl.BlockSpec((b_blk, C, hw_tile), lambda b, h: (b, 0, h)),
            pl.BlockSpec((b_blk, C, 1), lambda b, h: (b, 0, 0)),
        ],
        out_specs=pl.BlockSpec((b_blk, C, hw_tile), lambda b, h: (b, 0, h)),
        compiler_params=pltpu.CompilerParams(
            dimension_semantics=("parallel", "parallel"),
            vmem_limit_bytes=vmem_limit),
    )(x2, gate)

    return out[:, :, :HW].reshape(N, C, H, W)


def eca_reference(x, conv_w, k_size=3):
    """Pure-JAX reference mirroring the PyTorch module."""
    N, C, H, W = x.shape
    pad = (k_size - 1) // 2
    w = conv_w.reshape(-1)
    pooled = jnp.mean(x, axis=(2, 3))                      # (N, C)
    padded = jnp.pad(pooled, ((0, 0), (pad, pad)))         # (N, C + 2*pad)
    y = jnp.zeros((N, C), dtype=x.dtype)
    for j in range(k_size):
        y = y + w[j] * padded[:, j:j + C]
    gate = jax.nn.sigmoid(y)[:, :, None, None]             # (N, C, 1, 1)
    return x * gate


if __name__ == "__main__":
    key = jax.random.PRNGKey(0)
    kx, kw = jax.random.split(key)

    N, C, H, W = 2, 4, 16, 16
    k_size = 3
    x = jax.random.normal(kx, (N, C, H, W), dtype=jnp.float32)
    # Deterministic synthetic init for Conv1d(1, 1, k_size, bias=False) weight.
    conv_w = 0.5 * jax.random.normal(kw, (1, 1, k_size), dtype=jnp.float32)

    out = eca_forward(x, conv_w, k_size=k_size)
    out = jax.block_until_ready(out)

    ref = eca_reference(x, conv_w, k_size=k_size)
    assert out.shape == (N, C, H, W)
    assert jnp.allclose(out, ref, atol=1e-5, rtol=1e-5), "mismatch vs reference"

    print("KERNEL_OK")
</pallas_src>

<mosaic_0001>
module attributes {stable_mosaic.version = 11 : i64} {
  func.func @_pool_gate_kernel(%arg0: i32, %arg1: i32, %arg2: memref<3xf32, #tpu.memory_space<smem>>, %arg3: memref<2x4x256xf32, #tpu.memory_space<vmem>>, %arg4: memref<2x4x1xf32, #tpu.memory_space<vmem>>) attributes {dimension_semantics = [#tpu.dimension_semantics<parallel>, #tpu.dimension_semantics<arbitrary>], iteration_bounds = array<i64: 1, 1>, scalar_prefetch = 0 : i64, scratch_operands = 0 : i64, tpu.core_type = #tpu.core_type<tc>, window_params = [{transform_indices = @transform_0, window_bounds = array<i64: 3>}, {transform_indices = @transform_1, window_bounds = array<i64: 2, 4, 256>}, {transform_indices = @transform_2, window_bounds = array<i64: 2, 4, 1>}]} {
    %c0_i32 = arith.constant 0 : i32
    %0 = arith.cmpi eq, %arg1, %c0_i32 : i32
    %1 = arith.extui %0 : i1 to i32
    %c0_i32_0 = arith.constant 0 : i32
    %2 = arith.cmpi ne, %1, %c0_i32_0 : i32
    scf.if %2 {
      %cst_11 = arith.constant 0.000000e+00 : f32
      %12 = vector.broadcast %cst_11 : f32 to vector<2x4x1xf32>
      %c0_12 = arith.constant 0 : index
      %c0_13 = arith.constant 0 : index
      %c0_14 = arith.constant 0 : index
      %13 = vector.load %arg4[%c0_12, %c0_13, %c0_14] : memref<2x4x1xf32, #tpu.memory_space<vmem>>, vector<2x4x1xf32>
      tpu.vector_store %arg4[%c0_12, %c0_13, %c0_14], %12 {strides = array<i32>} : memref<2x4x1xf32, #tpu.memory_space<vmem>>, vector<2x4x1xf32>,
    } else {
    }
    %c0 = arith.constant 0 : index
    %c0_1 = arith.constant 0 : index
    %c0_2 = arith.constant 0 : index
    %3 = vector.load %arg3[%c0, %c0_1, %c0_2] : memref<2x4x256xf32, #tpu.memory_space<vmem>>, vector<2x4x256xf32>
    %c0_3 = arith.constant 0 : index
    %c0_4 = arith.constant 0 : index
    %c0_5 = arith.constant 0 : index
    %4 = vector.load %arg4[%c0_3, %c0_4, %c0_5] : memref<2x4x1xf32, #tpu.memory_space<vmem>>, vector<2x4x1xf32>
    %cst = arith.constant dense<0.000000e+00> : vector<2x4xf32>
    %5 = vector.multi_reduction <add>, %3, %cst [2] : vector<2x4x256xf32> to vector<2x4xf32>
    %6 = vector.shape_cast %5 : vector<2x4xf32> to vector<2x4x1xf32>
    %7 = arith.addf %4, %6 : vector<2x4x1xf32>
    %c0_6 = arith.constant 0 : index
    %c0_7 = arith.constant 0 : index
    %c0_8 = arith.constant 0 : index
    %8 = vector.load %arg4[%c0_6, %c0_7, %c0_8] : memref<2x4x1xf32, #tpu.memory_space<vmem>>, vector<2x4x1xf32>
    tpu.vector_store %arg4[%c0_6, %c0_7, %c0_8], %7 {strides = array<i32>} : memref<2x4x1xf32, #tpu.memory_space<vmem>>, vector<2x4x1xf32>,
    %c0_i32_9 = arith.constant 0 : i32
    %9 = arith.cmpi eq, %arg1, %c0_i32_9 : i32
    %10 = arith.extui %9 : i1 to i32
    %c0_i32_10 = arith.constant 0 : i32
    %11 = arith.cmpi ne, %10, %c0_i32_10 : i32
    scf.if %11 {
      %c0_11 = arith.constant 0 : index
      %c0_12 = arith.constant 0 : index
      %c0_13 = arith.constant 0 : index
      %12 = vector.load %arg4[%c0_11, %c0_12, %c0_13] : memref<2x4x1xf32, #tpu.memory_space<vmem>>, vector<2x4x1xf32>
      %cst_14 = arith.constant 3.906250e-03 : f32
      %13 = vector.broadcast %cst_14 : f32 to vector<2x4x1xf32>
      %14 = arith.mulf %12, %13 : vector<2x4x1xf32>
      %cst_15 = arith.constant 0.000000e+00 : f32
      %15 = vector.broadcast %cst_15 : f32 to vector<2x4x1xf32>
      %c0_16 = arith.constant 0 : index
      %16 = memref.load %arg2[%c0_16] : memref<3xf32, #tpu.memory_space<smem>>
      %cst_17 = arith.constant 0.000000e+00 : f32
      %17 = vector.broadcast %cst_17 : f32 to vector<2x1x1xf32>
      %18 = vector.extract_strided_slice %14 {offsets = [0, 0, 0], sizes = [2, 3, 1], strides = [1, 1, 1]} : vector<2x4x1xf32> to vector<2x3x1xf32>
      %19 = tpu.concatenate %17, %18 in 1 : vector<2x1x1xf32>, vector<2x3x1xf32> -> vector<2x4x1xf32>
      %20 = vector.broadcast %16 : f32 to vector<2x4x1xf32>
      %21 = arith.mulf %20, %19 : vector<2x4x1xf32>
      %22 = arith.addf %15, %21 : vector<2x4x1xf32>
      %c1 = arith.constant 1 : index
      %23 = memref.load %arg2[%c1] : memref<3xf32, #tpu.memory_space<smem>>
      %24 = vector.broadcast %23 : f32 to vector<2x4x1xf32>
      %25 = arith.mulf %24, %14 : vector<2x4x1xf32>
      %26 = arith.addf %22, %25 : vector<2x4x1xf32>
      %c2 = arith.constant 2 : index
      %27 = memref.load %arg2[%c2] : memref<3xf32, #tpu.memory_space<smem>>
      %cst_18 = arith.constant 0.000000e+00 : f32
      %28 = vector.broadcast %cst_18 : f32 to vector<2x1x1xf32>
      %29 = vector.extract_strided_slice %14 {offsets = [0, 1, 0], sizes = [2, 3, 1], strides = [1, 1, 1]} : vector<2x4x1xf32> to vector<2x3x1xf32>
      %30 = tpu.concatenate %29, %28 in 1 : vector<2x3x1xf32>, vector<2x1x1xf32> -> vector<2x4x1xf32>
      %31 = vector.broadcast %27 : f32 to vector<2x4x1xf32>
      %32 = arith.mulf %31, %30 : vector<2x4x1xf32>
      %33 = arith.addf %26, %32 : vector<2x4x1xf32>
      %34 = arith.negf %33 : vector<2x4x1xf32>
      %35 = math.exp %34 : vector<2x4x1xf32>
      %cst_19 = arith.constant 1.000000e+00 : f32
      %36 = vector.broadcast %cst_19 : f32 to vector<2x4x1xf32>
      %37 = arith.addf %36, %35 : vector<2x4x1xf32>
      %38 = arith.divf %36, %37 : vector<2x4x1xf32>
      %c0_20 = arith.constant 0 : index
      %c0_21 = arith.constant 0 : index
      %c0_22 = arith.constant 0 : index
      %39 = vector.load %arg4[%c0_20, %c0_21, %c0_22] : memref<2x4x1xf32, #tpu.memory_space<vmem>>, vector<2x4x1xf32>
      tpu.vector_store %arg4[%c0_20, %c0_21, %c0_22], %38 {strides = array<i32>} : memref<2x4x1xf32, #tpu.memory_space<vmem>>, vector<2x4x1xf32>,
    } else {
    }
    return
  }
  func.func @transform_0(%arg0: i32, %arg1: i32) -> i32 {
    %c0_i32 = arith.constant 0 : i32
    %c0_i32_0 = arith.constant 0 : i32
    return %c0_i32 : i32
  }
  func.func @transform_1(%arg0: i32, %arg1: i32) -> (i32, i32, i32) {
    %c0_i32 = arith.constant 0 : i32
    %c0_i32_0 = arith.constant 0 : i32
    return %arg0, %c0_i32, %arg1 : i32, i32, i32
  }
  func.func @transform_2(%arg0: i32, %arg1: i32) -> (i32, i32, i32) {
    %c0_i32 = arith.constant 0 : i32
    %c0_i32_0 = arith.constant 0 : i32
    %c0_i32_1 = arith.constant 0 : i32
    return %arg0, %c0_i32, %c0_i32_0 : i32, i32, i32
  }
}

</mosaic_0001>

<llo_original>
// kernel: tpu_custom_call.1
$region0: #{tpu_custom_call.1}
  #allocation0 [shape = 'u32[]', space=smem, size = 0x4, offset = 0x4, fixed_abs, tag = 'smem constant byte address 0x4 - core index']
  #allocation1 [shape = 'u32[144,128]{1,0:T(1,128)}', space=vmem, size = 0x12000, scoped, tag = 'internal scratch']
  %s0 = inlined_call_operand.hbm [shape: f32[3], index: 0, kind: input, shape index: {}]
  %s1 = inlined_call_operand.hbm [shape: f32[2,4,256], index: 1, kind: input, shape index: {}]
  %s2 = inlined_call_operand.vmem [shape: f32[2,4,1], index: 2, kind: output, shape index: {}]
  %s3 = sld [smem:[#allocation0]]
  $region34: #{tpu_custom_call.1} parent=0
    _
  %s5 = ssub.s32 1, %s3
  %s6 = scalar_select 0, %s5, %s3
  $region1: #{tpu_custom_call.1} parent=0
    #allocation2 [shape = 'u8[512]{0}', space=smem, size = 0x200, scoped, tag = 'input window, operand 0, single buffered']
    #allocation3 [shape = 's32[1]{0}', space=sflag, size = 0x4, scoped, tag = 'scoped memory for tpu_custom_call.1']
    #allocation4 [shape = 's32[1]{0}', space=sflag, size = 0x4, scoped, tag = 'scoped memory for tpu_custom_call.1']
    #allocation5 [shape = 'u8[8192]{0}', space=vmem, size = 0x2000, scoped, tag = 'input window, operand 1, single buffered']
    %7 = vsyncpa [#allocation4], 0
    %8 = vsyncpa [#allocation3], 0
    // Predicated region
    $region2: #{tpu_custom_call.1} parent=1 // pred_check
      _
    $region3: #{tpu_custom_call.1} parent=1 // pred_check_branch
      %10 = sbr.rel (0) target = $region5
    $region4: #{tpu_custom_call.1} parent=1 // pred_region
      %s12 = ssub.s32 16, 16
      %13 = vsyncadd [#allocation4], %s12
      %16 = dma.hbm_to_smem %s0, 16, [#allocation2], [#allocation4]
    $region5: #{tpu_custom_call.1} parent=1 // pred_fallthru
      _
    // Predicated region
    $region6: #{tpu_custom_call.1} parent=1 // pred_check
      _
    $region7: #{tpu_custom_call.1} parent=1 // pred_check_branch
      %18 = sbr.rel (0) target = $region9
    $region8: #{tpu_custom_call.1} parent=1 // pred_region
      %s20 = ssub.s32 256, 256
      %21 = vsyncadd [#allocation3], %s20
      %s22 = sshll.u32 [#allocation5], 4
      %s23 = int_to_ptr.vmem [resolvable:$true] %s22
      %28 = dma.hbm_to_vmem [thread:$0]  %s1, 256, %s23, [#allocation3], 128, 128, 8
    $region9: #{tpu_custom_call.1} parent=1 // pred_fallthru
      _
    // Predicated region
    $region10: #{tpu_custom_call.1} parent=1 // pred_check
      _
    $region11: #{tpu_custom_call.1} parent=1 // pred_check_branch
      %30 = sbr.rel (0) target = $region13
    $region12: #{tpu_custom_call.1} parent=1 // pred_region
      %31 = dma.done [#allocation4], 16
    $region13: #{tpu_custom_call.1} parent=1 // pred_fallthru
      _
    // Predicated region
    $region14: #{tpu_custom_call.1} parent=1 // pred_check
      _
    $region15: #{tpu_custom_call.1} parent=1 // pred_check_branch
      %33 = sbr.rel (0) target = $region17
    $region16: #{tpu_custom_call.1} parent=1 // pred_region
      %34 = dma.done [#allocation3], 256
    $region17: #{tpu_custom_call.1} parent=1 // pred_fallthru
      _
    %35 = sfence
    %p36 = scmp.eq.s32.totalorder 0, 0
    // Predicated region
    $region18: #{tpu_custom_call.1} parent=1 // pred_check
      %p37 = pneg %p36
    $region19: #{tpu_custom_call.1} parent=1 // pred_check_branch
      %39 = sbr.rel (%p37) target = $region21
    $region20: #{tpu_custom_call.1} parent=1 // pred_region
      %vm40 = vcmask 3072
      %41 = vst.msk [vmem:[%s2] sm:$0xf] %vm40, 0.0
      %42 = vst.msk [vmem:[%s2 + $0x4] sm:$0xf] %vm40, 0.0
    $region21: #{tpu_custom_call.1} parent=1 // pred_fallthru
      _
    %v43 = vld [vmem:[#allocation5] sm:$0xff]
    %v44 = vld [vmem:[#allocation5 + $0x8] sm:$0xff]
    %v45 = vld [vmem:[%s2] sm:$0xf]
    %v46 = vld [vmem:[%s2 + $0x4] sm:$0xf]
    %v49 = vcombine.high %v43, %v43
    %v50 = vcombine.high %v44, %v44
    %vm53 = vcmask 1043456
    %v54 = vsel %vm53, %v43, 0.0
    %v55 = vsel %vm53, %v49, 0.0
    %v56 = vadd.f32 %v54, %v55
    %57 = vadd.xlane.f32.xlu0 %v56
    %v58 = vpop.xlane.xlu0 %57
    %v59 = vsel %vm53, %v44, 0.0
    %v60 = vsel %vm53, %v50, 0.0
    %v61 = vadd.f32 %v59, %v60
    %62 = vadd.xlane.f32.xlu0 %v61
    %v63 = vpop.xlane.xlu0 %62
    %v64 = vadd.f32 %v45, %v58
    %v65 = vadd.f32 %v46, %v63
    %vm66 = vcmask 3072
    %67 = vst.msk [vmem:[%s2] sm:$0xf] %vm66, %v64
    %68 = vst.msk [vmem:[%s2 + $0x4] sm:$0xf] %vm66, %v65
    // Predicated region
    $region22: #{tpu_custom_call.1} parent=1 // pred_check
      %p69 = pneg %p36
    $region23: #{tpu_custom_call.1} parent=1 // pred_check_branch
      %71 = sbr.rel (%p69) target = $region25
    $region24: #{tpu_custom_call.1} parent=1 // pred_region
      %v72 = vld [vmem:[%s2] sm:$0xf]
      %v73 = vld [vmem:[%s2 + $0x4] sm:$0xf]
      %v74 = vmul.f32 %v72, 0.00390625
      %v75 = vmul.f32 %v73, 0.00390625
      %s76 = sld [smem:[#allocation2]]
      %v79 = vrot.slane %v74, 7
      %v80 = vrot.slane %v75, 7
      %vm83 = vcmask 1040384
      %v84 = vsel %vm83, 0.0, %v79
      %v85 = vsel %vm83, 0.0, %v80
      %v86 = vstv %s76
      %v87 = vmul.f32 %v86, %v84
      %v88 = vmul.f32 %v86, %v85
      %v89 = vadd.f32 %v87, 0.0
      %v90 = vadd.f32 %v88, 0.0
      %s91 = sld [smem:[#allocation2 + $0x1]]
      %v92 = vstv %s91
      %v93 = vmul.f32 %v92, %v74
      %v94 = vmul.f32 %v92, %v75
      %v95 = vadd.f32 %v89, %v93
      %v96 = vadd.f32 %v90, %v94
      %s97 = sld [smem:[#allocation2 + $0x2]]
      %v98 = vrot.slane %v74, 1
      %v99 = vrot.slane %v75, 1
      %vm102 = vcmask 1042432
      %v103 = vsel %vm102, %v98, 0.0
      %v104 = vsel %vm102, %v99, 0.0
      %v105 = vstv %s97
      %v106 = vmul.f32 %v105, %v103
      %v107 = vmul.f32 %v105, %v104
      %v108 = vadd.f32 %v95, %v106
      %v109 = vadd.f32 %v96, %v107
      %v110 = vxor.u32 %v108, 2147483648
      %v111 = vxor.u32 %v109, 2147483648
      %v112 = vmul.f32 %v110, 1.442695
      %v113 = vpow.pop %v112
      %v114 = vmul.f32 %v111, 1.442695
      %v115 = vpow.pop %v114
      %v116 = vadd.f32 %v113, 1.0
      %v117 = vadd.f32 %v115, 1.0
      %v118 = vrcp.pop %v116
      %v119 = vmul.f32 1.0, %v118
      %v120 = vrcp.pop %v117
      %v121 = vmul.f32 1.0, %v120
      %122 = vst.msk [vmem:[%s2] sm:$0xf] %vm66, %v119
      %123 = vst.msk [vmem:[%s2 + $0x4] sm:$0xf] %vm66, %v121
    $region25: #{tpu_custom_call.1} parent=1 // pred_fallthru
      _
    // Predicated region
    $region26: #{tpu_custom_call.1} parent=1 // pred_check
      _
    $region27: #{tpu_custom_call.1} parent=1 // pred_check_branch
      %125 = sbr.rel (0) target = $region29
    $region28: #{tpu_custom_call.1} parent=1 // pred_region
      _
    $region29: #{tpu_custom_call.1} parent=1 // pred_fallthru
      _
    // Predicated region
    $region30: #{tpu_custom_call.1} parent=1 // pred_check
      _
    $region31: #{tpu_custom_call.1} parent=1 // pred_check_branch
      %127 = sbr.rel (0) target = $region33
    $region32: #{tpu_custom_call.1} parent=1 // pred_region
      _
    $region33: #{tpu_custom_call.1} parent=1 // pred_fallthru
      _
    %128 = vsyncpa [#allocation3], 1
    %129 = vsyncpa [#allocation4], 1

</llo_original>
